<compile_context>
chip_gen: v7x
topology: tpu7x:2x2x1
jax: 0.10.0
libtpu: 0.0.40
codegen_flags: <defaults>
</compile_context>

<pallas_src>
import functools

import jax
import jax.numpy as jnp
from jax import lax
from jax.experimental import pallas as pl
from jax.experimental.pallas import tpu as pltpu


def _round_up(x, m):
    return ((x + m - 1) // m) * m


def _ff_norm_kernel(x_ref, w1_ref, b1_ref, w2_ref, b2_ref, o_ref, *, s_valid, e_valid):
    # x_ref/o_ref: (TB, S_pad, E_pad); w1_ref: (E_pad, F_pad); b1_ref: (1, F_pad);
    # w2_ref: (F_pad, E_pad); b2_ref: (1, E_pad).
    tb, s_pad, e_pad = x_ref.shape
    x = x_ref[...]
    # Layout-free merge: S_pad % 8 == 0 and E_pad % 128 == 0 (enforced by the wrapper).
    x2 = x.reshape(tb * s_pad, e_pad)

    # Feed-forward on the MXU (weights pre-transposed in the wrapper; f32 accumulation).
    h = jnp.dot(x2, w1_ref[...], preferred_element_type=jnp.float32)
    h = jnp.maximum(h + b1_ref[...], 0.0)
    y = jnp.dot(h.astype(w2_ref.dtype), w2_ref[...], preferred_element_type=jnp.float32)

    # Fused bias + residual (single VPU pass), back to (TB, S_pad, E_pad) in f32.
    r = (x2.astype(jnp.float32) + y + b2_ref[...]).reshape(tb, s_pad, e_pad)

    # Padded embed columns of r are exactly 0 by construction. Padded seq rows are not
    # (relu(b1) @ W2t + b2), so zero them only when S actually needed padding.
    if s_pad != s_valid:
        row = lax.broadcasted_iota(jnp.int32, (tb, s_pad, e_pad), 1)
        r = jnp.where(row < s_valid, r, 0.0)

    # Per-sample 'layer' norm over the TRUE (seq, embed) extent; torch.var is unbiased.
    # Single-pass moments: sum(r), sum(r*r); var = (sum(r^2) - n*mean^2) / (n - 1).
    n = s_valid * e_valid
    rsum = jnp.sum(jnp.sum(r, axis=2, keepdims=True), axis=1, keepdims=True)
    sqsum = jnp.sum(jnp.sum(r * r, axis=2, keepdims=True), axis=1, keepdims=True)
    mean = rsum * (1.0 / n)
    var = (sqsum - mean * rsum) * (1.0 / (n - 1))
    inv_std = lax.rsqrt(var + 1e-5)                      # EUP slot, effectively free
    o_ref[...] = ((r - mean) * inv_std).astype(o_ref.dtype)


def ff_and_norm_sublayer(input1, input2, ff1_params, ff2_params, *,
                         block_b=None, matmul_dtype=None):
    """FFandNormsubLayer.forward(input1, input2), normalization='layer'.

    ff*_params = (w_a (F,E), b_a (F,), w_b (E,F), b_b (E,)) in PyTorch Linear layout.
    matmul_dtype: optionally jnp.bfloat16 to run the two MXU matmuls in bf16 with f32
    accumulation (bias/residual/norm stay f32). Default None keeps full f32.
    """
    # TODO(synk): feed_forward_hidden == 0 (single Linear) variant not implemented.
    # TODO(synk): 'batch' / 'instance' normalization (running-stats) paths not implemented;
    # only the module's default 'layer' normalization is fused here.
    B, S, E = input1.shape
    assert input2.shape == (B, S, E)
    F = ff1_params[0].shape[0]

    E_pad = _round_up(E, 128)   # lane-dense output / matmul N,K
    F_pad = _round_up(F, 128)   # lane-dense hidden activations
    S_pad = _round_up(S, 8)     # sublane-aligned (TB,S,E)->(TB*S,E) reshape

    def prep_weights(params):
        wa, ba, wb, bb = params
        assert wa.shape == (F, E) and wb.shape == (E, F)
        w1t = jnp.pad(jnp.transpose(wa), ((0, E_pad - E), (0, F_pad - F)))   # (E_pad,F_pad)
        b1 = jnp.pad(ba.reshape(1, F), ((0, 0), (0, F_pad - F)))             # (1,F_pad)
        w2t = jnp.pad(jnp.transpose(wb), ((0, F_pad - F), (0, E_pad - E)))   # (F_pad,E_pad)
        b2 = jnp.pad(bb.reshape(1, E), ((0, 0), (0, E_pad - E)))             # (1,E_pad)
        return w1t, b1, w2t, b2

    w1a, b1a, w2a, b2a = prep_weights(ff1_params)
    w1b, b1b, w2b, b2b = prep_weights(ff2_params)
    # Stack branch weights: branch index = leading grid axis.
    w1_s = jnp.stack([w1a, w1b], axis=0)     # (2, E_pad, F_pad)
    b1_s = jnp.stack([b1a, b1b], axis=0)     # (2, 1, F_pad)
    w2_s = jnp.stack([w2a, w2b], axis=0)     # (2, F_pad, E_pad)
    b2_s = jnp.stack([b2a, b2b], axis=0)     # (2, 1, E_pad)

    if matmul_dtype is not None:
        w1_s = w1_s.astype(matmul_dtype)
        w2_s = w2_s.astype(matmul_dtype)

    # Per-generation VMEM budget: physical capacity (v5e/v6e 128 MiB, v7x 64 MiB) minus
    # ~25% headroom for compiler scratch / pipeline buffers.
    try:
        vmem_cap = int(pltpu.get_tpu_info().vmem_capacity_bytes)
    except Exception:
        vmem_cap = 64 * 1024 * 1024
    vmem_limit = max(min((vmem_cap * 3) // 4, 96 * 1024 * 1024), 32 * 1024 * 1024)

    act_dtype = input1.dtype if matmul_dtype is None else jnp.dtype(matmul_dtype)
    itemsize = jnp.dtype(act_dtype).itemsize

    # Batch tile: target ~2048 rows of matmul work per grid step (amortizes the ~0.35us
    # per-step overhead and MXU fill/drain), shrink if the VMEM footprint would not fit.
    if block_b is None:
        block_b = max(1, min(B, 2048 // max(S_pad, 1)))
    block_b = max(1, min(block_b, B))

    def tile_bytes(bb):
        rows = bb * S_pad
        act = 2 * 2 * rows * E_pad * itemsize                 # x + out, double-buffered
        tmp = rows * (F_pad + 2 * E_pad) * 4                  # h + y/r f32 temporaries
        wgt = 2 * 2 * (2 * E_pad * F_pad + F_pad + E_pad) * 4  # resident weights (dbl-buf)
        return act + tmp + wgt

    while block_b > 1 and tile_bytes(block_b) > (vmem_limit * 3) // 5:
        block_b = max(1, block_b // 2)

    # Pad B up to a multiple of block_b (no divisor fallback); padded samples produce
    # self-contained garbage (per-sample norm) and are sliced off below.
    B_pad = _round_up(B, block_b)
    grid_b = B_pad // block_b

    def prep_x(x):
        x = jnp.pad(x, ((0, B_pad - B), (0, S_pad - S), (0, E_pad - E)))
        return x.astype(act_dtype) if matmul_dtype is not None else x

    x_s = jnp.stack([prep_x(input1), prep_x(input2)], axis=0)   # (2, B_pad, S_pad, E_pad)

    flops = 2 * 4 * B_pad * S_pad * E_pad * F_pad
    bytes_accessed = int(
        2 * B_pad * S_pad * E_pad * itemsize            # stacked x in
        + 2 * B_pad * S_pad * E_pad * jnp.dtype(input1.dtype).itemsize   # stacked out
        + 2 * (2 * E_pad * F_pad + F_pad + E_pad) * 4)  # resident weights / biases

    kernel = functools.partial(_ff_norm_kernel, s_valid=S, e_valid=E)

    act_spec = pl.BlockSpec((pl.Squeezed(), block_b, S_pad, E_pad),
                            lambda br, i: (br, i, 0, 0))
    out = pl.pallas_call(
        kernel,
        out_shape=jax.ShapeDtypeStruct((2, B_pad, S_pad, E_pad), input1.dtype),
        grid_spec=pltpu.PrefetchScalarGridSpec(
            num_scalar_prefetch=0,
            grid=(2, grid_b),                                    # (branch, batch tiles)
            in_specs=[
                act_spec,                                        # x tile (pipelined)
                pl.BlockSpec((pl.Squeezed(), E_pad, F_pad), lambda br, i: (br, 0, 0)),
                pl.BlockSpec((pl.Squeezed(), 1, F_pad), lambda br, i: (br, 0, 0)),
                pl.BlockSpec((pl.Squeezed(), F_pad, E_pad), lambda br, i: (br, 0, 0)),
                pl.BlockSpec((pl.Squeezed(), 1, E_pad), lambda br, i: (br, 0, 0)),
            ],
            out_specs=pl.BlockSpec((pl.Squeezed(), block_b, S_pad, E_pad),
                                   lambda br, i: (br, i, 0, 0)),
        ),
        compiler_params=pltpu.CompilerParams(
            dimension_semantics=("parallel", "parallel"),   # branch x batch: independent
            vmem_limit_bytes=int(vmem_limit),
        ),
        cost_estimate=pl.CostEstimate(
            flops=flops, transcendentals=2 * B_pad, bytes_accessed=bytes_accessed),
    )(x_s, w1_s, b1_s, w2_s, b2_s)

    out1 = out[0, :B, :S, :E]
    out2 = out[1, :B, :S, :E]
    return out1, out2


if __name__ == "__main__":
    B, S, E, F = 4, 8, 32, 64    # batch=4, seq=8, embed_dim=32, feed_forward_hidden=64
    key = jax.random.PRNGKey(0)
    ks = jax.random.split(key, 10)

    x1 = jax.random.normal(ks[0], (B, S, E), dtype=jnp.float32)
    x2 = jax.random.normal(ks[1], (B, S, E), dtype=jnp.float32)

    # nn.Linear default init: uniform(-1/sqrt(in_features), 1/sqrt(in_features))
    def lin_init(kw, kb, out_d, in_d):
        bound = 1.0 / (in_d ** 0.5)
        w = jax.random.uniform(kw, (out_d, in_d), jnp.float32, -bound, bound)
        b = jax.random.uniform(kb, (out_d,), jnp.float32, -bound, bound)
        return w, b

    w11, b11 = lin_init(ks[2], ks[3], F, E)   # FF1 first Linear
    w12, b12 = lin_init(ks[4], ks[5], E, F)   # FF1 second Linear
    w21, b21 = lin_init(ks[6], ks[7], F, E)   # FF2 first Linear
    w22, b22 = lin_init(ks[8], ks[9], E, F)   # FF2 second Linear

    out1, out2 = ff_and_norm_sublayer(
        x1, x2, (w11, b11, w12, b12), (w21, b21, w22, b22))
    out1 = jax.block_until_ready(out1)
    out2 = jax.block_until_ready(out2)

    # Plain-JAX reference mirroring the PyTorch forward (torch.var is unbiased, ddof=1).
    def ref_branch(x, wa, ba, wb, bb):
        h = jnp.maximum(jnp.einsum("bse,fe->bsf", x, wa) + ba, 0.0)
        y = jnp.einsum("bsf,ef->bse", h, wb) + bb
        r = x + y
        mean = jnp.mean(r, axis=(1, 2), keepdims=True)
        var = jnp.var(r, axis=(1, 2), keepdims=True, ddof=1)
        return (r - mean) / jnp.sqrt(var + 1e-5)

    ref1 = ref_branch(x1, w11, b11, w12, b12)
    ref2 = ref_branch(x2, w21, b21, w22, b22)
    assert jnp.allclose(out1, ref1, atol=1e-4, rtol=1e-4), "branch 1 mismatch vs reference"
    assert jnp.allclose(out2, ref2, atol=1e-4, rtol=1e-4), "branch 2 mismatch vs reference"

    print("KERNEL_OK")
</pallas_src>

<mosaic_0001>
module attributes {stable_mosaic.version = 11 : i64} {
  func.func @_ff_norm_kernel(%arg0: i32, %arg1: i32, %arg2: memref<1x4x8x128xf32, #tpu.memory_space<vmem>>, %arg3: memref<1x128x128xf32, #tpu.memory_space<vmem>>, %arg4: memref<1x1x128xf32, #tpu.memory_space<vmem>>, %arg5: memref<1x128x128xf32, #tpu.memory_space<vmem>>, %arg6: memref<1x1x128xf32, #tpu.memory_space<vmem>>, %arg7: memref<1x4x8x128xf32, #tpu.memory_space<vmem>>) attributes {dimension_semantics = [#tpu.dimension_semantics<parallel>, #tpu.dimension_semantics<parallel>], iteration_bounds = array<i64: 2, 1>, scalar_prefetch = 0 : i64, scratch_operands = 0 : i64, tpu.core_type = #tpu.core_type<tc>, window_params = [{transform_indices = @transform_0, window_bounds = array<i64: 1, 4, 8, 128>}, {transform_indices = @transform_1, window_bounds = array<i64: 1, 128, 128>}, {transform_indices = @transform_2, window_bounds = array<i64: 1, 1, 128>}, {transform_indices = @transform_3, window_bounds = array<i64: 1, 128, 128>}, {transform_indices = @transform_4, window_bounds = array<i64: 1, 1, 128>}, {transform_indices = @transform_5, window_bounds = array<i64: 1, 4, 8, 128>}]} {
    %c0 = arith.constant 0 : index
    %c0_0 = arith.constant 0 : index
    %c0_1 = arith.constant 0 : index
    %c0_2 = arith.constant 0 : index
    %0 = vector.load %arg2[%c0, %c0_0, %c0_1, %c0_2] : memref<1x4x8x128xf32, #tpu.memory_space<vmem>>, vector<1x4x8x128xf32>
    %1 = vector.shape_cast %0 : vector<1x4x8x128xf32> to vector<4x8x128xf32>
    %2 = vector.shape_cast %1 : vector<4x8x128xf32> to vector<32x128xf32>
    %c0_3 = arith.constant 0 : index
    %c0_4 = arith.constant 0 : index
    %c0_5 = arith.constant 0 : index
    %3 = vector.load %arg3[%c0_3, %c0_4, %c0_5] : memref<1x128x128xf32, #tpu.memory_space<vmem>>, vector<1x128x128xf32>
    %4 = vector.shape_cast %3 : vector<1x128x128xf32> to vector<128x128xf32>
    %cst = arith.constant dense<0.000000e+00> : vector<32x128xf32>
    %5 = tpu.matmul %2, %4, %cst {dimension_numbers = #tpu.dot_dimension_numbers<[1], [0], [0], [1], [0, 0, 1, 1], [], []>} : vector<32x128xf32>, vector<128x128xf32>, vector<32x128xf32> -> vector<32x128xf32>
    %c0_6 = arith.constant 0 : index
    %c0_7 = arith.constant 0 : index
    %c0_8 = arith.constant 0 : index
    %6 = vector.load %arg4[%c0_6, %c0_7, %c0_8] : memref<1x1x128xf32, #tpu.memory_space<vmem>>, vector<1x1x128xf32>
    %7 = vector.shape_cast %6 : vector<1x1x128xf32> to vector<1x128xf32>
    %8 = vector.broadcast %7 : vector<1x128xf32> to vector<32x128xf32>
    %9 = arith.addf %5, %8 : vector<32x128xf32>
    %cst_9 = arith.constant 0.000000e+00 : f32
    %10 = vector.broadcast %cst_9 : f32 to vector<32x128xf32>
    %11 = arith.maximumf %9, %10 : vector<32x128xf32>
    %c0_10 = arith.constant 0 : index
    %c0_11 = arith.constant 0 : index
    %c0_12 = arith.constant 0 : index
    %12 = vector.load %arg5[%c0_10, %c0_11, %c0_12] : memref<1x128x128xf32, #tpu.memory_space<vmem>>, vector<1x128x128xf32>
    %13 = vector.shape_cast %12 : vector<1x128x128xf32> to vector<128x128xf32>
    %cst_13 = arith.constant dense<0.000000e+00> : vector<32x128xf32>
    %14 = tpu.matmul %11, %13, %cst_13 {dimension_numbers = #tpu.dot_dimension_numbers<[1], [0], [0], [1], [0, 0, 1, 1], [], []>} : vector<32x128xf32>, vector<128x128xf32>, vector<32x128xf32> -> vector<32x128xf32>
    %15 = arith.addf %2, %14 : vector<32x128xf32>
    %c0_14 = arith.constant 0 : index
    %c0_15 = arith.constant 0 : index
    %c0_16 = arith.constant 0 : index
    %16 = vector.load %arg6[%c0_14, %c0_15, %c0_16] : memref<1x1x128xf32, #tpu.memory_space<vmem>>, vector<1x1x128xf32>
    %17 = vector.shape_cast %16 : vector<1x1x128xf32> to vector<1x128xf32>
    %18 = vector.broadcast %17 : vector<1x128xf32> to vector<32x128xf32>
    %19 = arith.addf %15, %18 : vector<32x128xf32>
    %20 = vector.shape_cast %19 : vector<32x128xf32> to vector<4x8x128xf32>
    %cst_17 = arith.constant dense<0.000000e+00> : vector<4x8xf32>
    %21 = vector.multi_reduction <add>, %20, %cst_17 [2] : vector<4x8x128xf32> to vector<4x8xf32>
    %22 = vector.shape_cast %21 : vector<4x8xf32> to vector<4x8x1xf32>
    %cst_18 = arith.constant dense<0.000000e+00> : vector<4x1xf32>
    %23 = vector.multi_reduction <add>, %22, %cst_18 [1] : vector<4x8x1xf32> to vector<4x1xf32>
    %24 = vector.shape_cast %23 : vector<4x1xf32> to vector<4x1x1xf32>
    %25 = arith.mulf %20, %20 : vector<4x8x128xf32>
    %cst_19 = arith.constant dense<0.000000e+00> : vector<4x8xf32>
    %26 = vector.multi_reduction <add>, %25, %cst_19 [2] : vector<4x8x128xf32> to vector<4x8xf32>
    %27 = vector.shape_cast %26 : vector<4x8xf32> to vector<4x8x1xf32>
    %cst_20 = arith.constant dense<0.000000e+00> : vector<4x1xf32>
    %28 = vector.multi_reduction <add>, %27, %cst_20 [1] : vector<4x8x1xf32> to vector<4x1xf32>
    %29 = vector.shape_cast %28 : vector<4x1xf32> to vector<4x1x1xf32>
    %cst_21 = arith.constant 3.906250e-03 : f32
    %30 = vector.broadcast %cst_21 : f32 to vector<4x1x1xf32>
    %31 = arith.mulf %24, %30 : vector<4x1x1xf32>
    %32 = arith.mulf %31, %24 : vector<4x1x1xf32>
    %33 = arith.subf %29, %32 : vector<4x1x1xf32>
    %cst_22 = arith.constant 0.00392156886 : f32
    %34 = vector.broadcast %cst_22 : f32 to vector<4x1x1xf32>
    %35 = arith.mulf %33, %34 : vector<4x1x1xf32>
    %cst_23 = arith.constant 9.99999974E-6 : f32
    %36 = vector.broadcast %cst_23 : f32 to vector<4x1x1xf32>
    %37 = arith.addf %35, %36 : vector<4x1x1xf32>
    %38 = math.rsqrt %37 : vector<4x1x1xf32>
    %39 = vector.broadcast %31 : vector<4x1x1xf32> to vector<4x8x128xf32>
    %40 = arith.subf %20, %39 : vector<4x8x128xf32>
    %41 = vector.broadcast %38 : vector<4x1x1xf32> to vector<4x8x128xf32>
    %42 = arith.mulf %40, %41 : vector<4x8x128xf32>
    %c0_24 = arith.constant 0 : index
    %c0_25 = arith.constant 0 : index
    %c0_26 = arith.constant 0 : index
    %c0_27 = arith.constant 0 : index
    %43 = vector.load %arg7[%c0_24, %c0_25, %c0_26, %c0_27] : memref<1x4x8x128xf32, #tpu.memory_space<vmem>>, vector<1x4x8x128xf32>
    %44 = vector.shape_cast %43 : vector<1x4x8x128xf32> to vector<4x8x128xf32>
    %45 = vector.shape_cast %42 : vector<4x8x128xf32> to vector<1x4x8x128xf32>
    tpu.vector_store %arg7[%c0_24, %c0_25, %c0_26, %c0_27], %45 {strides = array<i32>} : memref<1x4x8x128xf32, #tpu.memory_space<vmem>>, vector<1x4x8x128xf32>,
    return
  }
  func.func @transform_0(%arg0: i32, %arg1: i32) -> (i32, i32, i32, i32) {
    %c0_i32 = arith.constant 0 : i32
    %c0_i32_0 = arith.constant 0 : i32
    %c0_i32_1 = arith.constant 0 : i32
    return %arg0, %arg1, %c0_i32, %c0_i32_0 : i32, i32, i32, i32
  }
  func.func @transform_1(%arg0: i32, %arg1: i32) -> (i32, i32, i32) {
    %c0_i32 = arith.constant 0 : i32
    %c0_i32_0 = arith.constant 0 : i32
    %c0_i32_1 = arith.constant 0 : i32
    return %arg0, %c0_i32, %c0_i32_0 : i32, i32, i32
  }
  func.func @transform_2(%arg0: i32, %arg1: i32) -> (i32, i32, i32) {
    %c0_i32 = arith.constant 0 : i32
    %c0_i32_0 = arith.constant 0 : i32
    %c0_i32_1 = arith.constant 0 : i32
    return %arg0, %c0_i32, %c0_i32_0 : i32, i32, i32
  }
  func.func @transform_3(%arg0: i32, %arg1: i32) -> (i32, i32, i32) {
    %c0_i32 = arith.constant 0 : i32
    %c0_i32_0 = arith.constant 0 : i32
    %c0_i32_1 = arith.constant 0 : i32
    return %arg0, %c0_i32, %c0_i32_0 : i32, i32, i32
  }
  func.func @transform_4(%arg0: i32, %arg1: i32) -> (i32, i32, i32) {
    %c0_i32 = arith.constant 0 : i32
    %c0_i32_0 = arith.constant 0 : i32
    %c0_i32_1 = arith.constant 0 : i32
    return %arg0, %c0_i32, %c0_i32_0 : i32, i32, i32
  }
  func.func @transform_5(%arg0: i32, %arg1: i32) -> (i32, i32, i32, i32) {
    %c0_i32 = arith.constant 0 : i32
    %c0_i32_0 = arith.constant 0 : i32
    %c0_i32_1 = arith.constant 0 : i32
    return %arg0, %arg1, %c0_i32, %c0_i32_0 : i32, i32, i32, i32
  }
}

</mosaic_0001>

<llo_original>
// kernel: tpu_custom_call.1
$region0: #{tpu_custom_call.1}
  #allocation0 [shape = 'u32[]', space=smem, size = 0x4, offset = 0x4, fixed_abs, tag = 'smem constant byte address 0x4 - core index']
  #allocation1 [shape = 'u32[144,128]{1,0:T(1,128)}', space=vmem, size = 0x12000, scoped, tag = 'internal scratch']
  %s0 = inlined_call_operand.hbm [shape: f32[2,4,8,128], index: 0, kind: input, shape index: {}]
  %s1 = inlined_call_operand.hbm [shape: f32[2,128,128], index: 1, kind: input, shape index: {}]
  %s2 = inlined_call_operand.vmem [shape: f32[2,1,128], index: 2, kind: input, shape index: {}]
  %s3 = inlined_call_operand.hbm [shape: f32[2,128,128], index: 3, kind: input, shape index: {}]
  %s4 = inlined_call_operand.vmem [shape: f32[2,1,128], index: 4, kind: input, shape index: {}]
  %s5 = inlined_call_operand.hbm [shape: f32[2,4,8,128], index: 5, kind: output, shape index: {}]
  %s6 = sld [smem:[#allocation0]]
  $region65: #{tpu_custom_call.1} parent=0
    _
  %s8 = ssub.s32 1, %s6
  %s9 = scalar_select 0, %s8, %s6
  $region1: #{tpu_custom_call.1} parent=0
    #allocation2 [shape = 'u8[32768]{0}', space=vmem, size = 0x8000, scoped, tag = 'input window, operand 0']
    #allocation3 [shape = 's32[2]{0}', space=sflag, size = 0x8, scoped, tag = 'scoped memory for tpu_custom_call.1']
    #allocation4 [shape = 's32[2]{0}', space=sflag, size = 0x8, scoped, tag = 'scoped memory for tpu_custom_call.1']
    #allocation5 [shape = 'u8[131072]{0}', space=vmem, size = 0x20000, scoped, tag = 'input window, operand 1']
    #allocation6 [shape = 's32[2]{0}', space=sflag, size = 0x8, scoped, tag = 'scoped memory for tpu_custom_call.1']
    #allocation7 [shape = 'u8[131072]{0}', space=vmem, size = 0x20000, scoped, tag = 'input window, operand 3']
    #allocation8 [shape = 'u8[32768]{0}', space=vmem, size = 0x8000, scoped, tag = 'output window, operand 0']
    %10 = vsyncpa [#allocation3], 0
    %s11 = scalar_lea.sflag [#allocation3], 1
    %12 = vsyncpa %s11, 0
    %13 = vsyncpa [#allocation6], 0
    %s14 = scalar_lea.sflag [#allocation6], 1
    %15 = vsyncpa %s14, 0
    %16 = vsyncpa [#allocation4], 0
    %s17 = scalar_lea.sflag [#allocation4], 1
    %18 = vsyncpa %s17, 0
    loop: start=0, step=1, limit=4
    $region2: #{tpu_custom_call.1} parent=1 // loop_pre_header
      _
    $region3: #{tpu_custom_call.1} parent=1 // loop_header
      %s20 = sphi 0, %s24
      %p21 = scmp.ge.s32.totalorder %s20, 4
      %s27 = sphi 0, %s39
      %s28 = sphi 0, %s35
      %s29 = sphi 0, %s27
      %s30 = sphi 0, %s28
      %s31 = sphi 0, %s29
      %s32 = sphi 0, %s30
      %s44 = sphi 0, %s46
      %s47 = sphi 0, %s44
      %s48 = sphi 0, %s47
      %s64 = sphi 0, %s48
      %s70 = sphi 0, %s72
      %s73 = sphi 0, %s70
      %s74 = sphi 0, %s73
      %s90 = sphi 0, %s74
      %s96 = sphi 0, %s98
      %s99 = sphi 0, %s96
      %s100 = sphi 0, %s99
      %s116 = sphi 0, %s100
      %s122 = sphi 0, %s124
      %s125 = sphi 0, %s122
      %s126 = sphi 0, %s125
      %s142 = sphi 0, %s126
      %s148 = sphi 0, %s150
      %s151 = sphi 0, %s148
      %s152 = sphi 0, %s151
      %s168 = sphi 0, %s152
      %s176 = sphi 0, %s178
      %s179 = sphi 0, %s176
      %s180 = sphi 0, %s179
      %s196 = sphi 0, %s180
    $region4: #{tpu_custom_call.1} parent=1 // loop_header_branch
      %23 = sbr.rel (%p21) target = $region8
    $region5: #{tpu_custom_call.1} parent=1 // loop_body
      %s25 = ssub.s32 %s20, 1
      %s26 = ssub.s32 %s20, 2
      %s33 = sadd.s32 1, %s28
      %p34 = scmp.ge.s32.totalorder %s33, 1
      %s35 = scalar_select %p34, 0, %s33
      %s36 = sadd.s32 1, %s27
      %s37 = scalar_select %p34, %s36, %s27
      %p38 = scmp.ge.s32.totalorder %s37, 2
      %s39 = scalar_select %p38, 0, %s37
      %s40 = ssub.s32 %s27, %s39
      %s41 = ssub.s32 %s28, %s35
      %s42 = sor.u32 %s40, %s41
      %p43 = scmp.eq.s32.totalorder %s42, 0
      %s45 = sadd.s32 %s44, 1
      %s46 = scalar_select %p43, %s44, %s45
      %p49 = pneg %p43
      %p50 = scmp.eq.s32.totalorder %s20, 1
      %p51 = por %p49, %p50
      %p52 = scmp.ne.s32.totalorder %s44, %s47
      %p53 = scmp.eq.s32.totalorder %s20, 0
      %p54 = por %p52, %p53
      %p55 = scmp.ne.s32.totalorder %s44, %s47
      %p56 = scmp.eq.s32.totalorder %s25, 1
      %p57 = por %p55, %p56
      %p58 = scmp.ne.s32.totalorder %s47, %s48
      %p59 = scmp.eq.s32.totalorder %s25, 0
      %p60 = por %p58, %p59
      %p61 = scmp.ne.s32.totalorder %s47, %s48
      %p62 = scmp.eq.s32.totalorder %s26, 1
      %p63 = por %p61, %p62
      %p65 = scmp.ne.s32.totalorder %s48, %s64
      %p66 = scmp.eq.s32.totalorder %s26, 0
      %p67 = por %p65, %p66
      %s68 = ssub.s32 %s27, %s39
      %p69 = scmp.eq.s32.totalorder %s68, 0
      %s71 = sadd.s32 %s70, 1
      %s72 = scalar_select %p69, %s70, %s71
      %p75 = pneg %p69
      %p76 = scmp.eq.s32.totalorder %s20, 1
      %p77 = por %p75, %p76
      %p78 = scmp.ne.s32.totalorder %s70, %s73
      %p79 = scmp.eq.s32.totalorder %s20, 0
      %p80 = por %p78, %p79
      %p81 = scmp.ne.s32.totalorder %s70, %s73
      %p82 = scmp.eq.s32.totalorder %s25, 1
      %p83 = por %p81, %p82
      %p84 = scmp.ne.s32.totalorder %s73, %s74
      %p85 = scmp.eq.s32.totalorder %s25, 0
      %p86 = por %p84, %p85
      %p87 = scmp.ne.s32.totalorder %s73, %s74
      %p88 = scmp.eq.s32.totalorder %s26, 1
      %p89 = por %p87, %p88
      %p91 = scmp.ne.s32.totalorder %s74, %s90
      %p92 = scmp.eq.s32.totalorder %s26, 0
      %p93 = por %p91, %p92
      %s94 = ssub.s32 %s27, %s39
      %p95 = scmp.eq.s32.totalorder %s94, 0
      %s97 = sadd.s32 %s96, 1
      %s98 = scalar_select %p95, %s96, %s97
      %p101 = pneg %p95
      %p102 = scmp.eq.s32.totalorder %s20, 1
      %p103 = por %p101, %p102
      %p104 = scmp.ne.s32.totalorder %s96, %s99
      %p105 = scmp.eq.s32.totalorder %s20, 0
      %p106 = por %p104, %p105
      %p107 = scmp.ne.s32.totalorder %s96, %s99
      %p108 = scmp.eq.s32.totalorder %s25, 1
      %p109 = por %p107, %p108
      %p110 = scmp.ne.s32.totalorder %s99, %s100
      %p111 = scmp.eq.s32.totalorder %s25, 0
      %p112 = por %p110, %p111
      %p113 = scmp.ne.s32.totalorder %s99, %s100
      %p114 = scmp.eq.s32.totalorder %s26, 1
      %p115 = por %p113, %p114
      %p117 = scmp.ne.s32.totalorder %s100, %s116
      %p118 = scmp.eq.s32.totalorder %s26, 0
      %p119 = por %p117, %p118
      %s120 = ssub.s32 %s27, %s39
      %p121 = scmp.eq.s32.totalorder %s120, 0
      %s123 = sadd.s32 %s122, 1
      %s124 = scalar_select %p121, %s122, %s123
      %p127 = pneg %p121
      %p128 = scmp.eq.s32.totalorder %s20, 1
      %p129 = por %p127, %p128
      %p130 = scmp.ne.s32.totalorder %s122, %s125
      %p131 = scmp.eq.s32.totalorder %s20, 0
      %p132 = por %p130, %p131
      %p133 = scmp.ne.s32.totalorder %s122, %s125
      %p134 = scmp.eq.s32.totalorder %s25, 1
      %p135 = por %p133, %p134
      %p136 = scmp.ne.s32.totalorder %s125, %s126
      %p137 = scmp.eq.s32.totalorder %s25, 0
      %p138 = por %p136, %p137
      %p139 = scmp.ne.s32.totalorder %s125, %s126
      %p140 = scmp.eq.s32.totalorder %s26, 1
      %p141 = por %p139, %p140
      %p143 = scmp.ne.s32.totalorder %s126, %s142
      %p144 = scmp.eq.s32.totalorder %s26, 0
      %p145 = por %p143, %p144
      %s146 = ssub.s32 %s27, %s39
      %p147 = scmp.eq.s32.totalorder %s146, 0
      %s149 = sadd.s32 %s148, 1
      %s150 = scalar_select %p147, %s148, %s149
      %p153 = pneg %p147
      %p154 = scmp.eq.s32.totalorder %s20, 1
      %p155 = por %p153, %p154
      %p156 = scmp.ne.s32.totalorder %s148, %s151
      %p157 = scmp.eq.s32.totalorder %s20, 0
      %p158 = por %p156, %p157
      %p159 = scmp.ne.s32.totalorder %s148, %s151
      %p160 = scmp.eq.s32.totalorder %s25, 1
      %p161 = por %p159, %p160
      %p162 = scmp.ne.s32.totalorder %s151, %s152
      %p163 = scmp.eq.s32.totalorder %s25, 0
      %p164 = por %p162, %p163
      %p165 = scmp.ne.s32.totalorder %s151, %s152
      %p166 = scmp.eq.s32.totalorder %s26, 1
      %p167 = por %p165, %p166
      %p169 = scmp.ne.s32.totalorder %s152, %s168
      %p170 = scmp.eq.s32.totalorder %s26, 0
      %p171 = por %p169, %p170
      %s172 = ssub.s32 %s27, %s39
      %s173 = ssub.s32 %s28, %s35
      %s174 = sor.u32 %s172, %s173
      %p175 = scmp.eq.s32.totalorder %s174, 0
      %s177 = sadd.s32 %s176, 1
      %s178 = scalar_select %p175, %s176, %s177
      %p181 = pneg %p175
      %p182 = scmp.eq.s32.totalorder %s20, 1
      %p183 = por %p181, %p182
      %p184 = scmp.ne.s32.totalorder %s176, %s179
      %p185 = scmp.eq.s32.totalorder %s20, 0
      %p186 = por %p184, %p185
      %p187 = scmp.ne.s32.totalorder %s176, %s179
      %p188 = scmp.eq.s32.totalorder %s25, 1
      %p189 = por %p187, %p188
      %p190 = scmp.ne.s32.totalorder %s179, %s180
      %p191 = scmp.eq.s32.totalorder %s25, 0
      %p192 = por %p190, %p191
      %p193 = scmp.ne.s32.totalorder %s179, %s180
      %p194 = scmp.eq.s32.totalorder %s26, 1
      %p195 = por %p193, %p194
      %p197 = scmp.ne.s32.totalorder %s180, %s196
      %p198 = scmp.eq.s32.totalorder %s26, 0
      %p199 = por %p197, %p198
      %p200 = scmp.le.s32.totalorder 1, %s20
      %p201 = scmp.lt.s32.totalorder %s20, 3
      %p202 = pnand %p200, %p201
      %p203 = pneg %p202
      // Predicated region
      $region9: #{tpu_custom_call.1} parent=5 // pred_check
        _
      $region10: #{tpu_custom_call.1} parent=5 // pred_check_branch
        %205 = sbr.rel (%p202) target = $region12
      $region11: #{tpu_custom_call.1} parent=5 // pred_region
        %s206 = ssub.s32 %s20, 1
      $region12: #{tpu_custom_call.1} parent=5 // pred_fallthru
        _
      %p207 = scmp.lt.s32.totalorder %s20, 2
      // Predicated region
      $region13: #{tpu_custom_call.1} parent=5 // pred_check
        %p208 = pneg %p207
      $region14: #{tpu_custom_call.1} parent=5 // pred_check_branch
        %210 = sbr.rel (%p208) target = $region16
      $region15: #{tpu_custom_call.1} parent=5 // pred_region
        // Predicated region
        $region17: #{tpu_custom_call.1} parent=15 // pred_check
          %p211 = pneg %p54
        $region18: #{tpu_custom_call.1} parent=15 // pred_check_branch
          %213 = sbr.rel (%p211) target = $region20
        $region19: #{tpu_custom_call.1} parent=15 // pred_region
          %s214 = sand.u32 %s44, 1
          %s215 = scalar_lea.sflag [#allocation3], %s214
          %s216 = sand.u32 %s44, 1
          %s217 = smul.addr %s216, 32
          %s218 = scalar_lea.vmem [#allocation2], %s217
          %s219 = smul.u32 4, %s28
          %s221 = ssub.s32 512, 512
          %222 = vsyncadd %s215, %s221
          %s223 = smul.addr %s27, 4
          %s224 = sadd.s32 %s219, %s223
          %s225 = smul.addr %s224, 128
          %s226 = scalar_lea.hbm %s0, %s225
          %s227 = sshll.u32 %s218, 4
          %s228 = int_to_ptr.vmem [resolvable:$true] %s227
          %233 = dma.hbm_to_vmem [thread:$0]  %s226, 512, %s228, %s215, 128, 128, 8
        $region20: #{tpu_custom_call.1} parent=15 // pred_fallthru
          _
        // Predicated region
        $region21: #{tpu_custom_call.1} parent=15 // pred_check
          %p234 = pneg %p80
        $region22: #{tpu_custom_call.1} parent=15 // pred_check_branch
          %236 = sbr.rel (%p234) target = $region24
        $region23: #{tpu_custom_call.1} parent=15 // pred_region
          %s237 = sand.u32 %s20, 1
          %s238 = scalar_lea.sflag [#allocation6], %s237
          %s239 = sand.u32 %s70, 1
          %s240 = smul.addr %s239, 128
          %s241 = scalar_lea.vmem [#allocation5], %s240
          %s243 = ssub.s32 2048, 2048
          %244 = vsyncadd %s238, %s243
          %s245 = smul.addr %s27, 16
          %s246 = smul.addr %s245, 128
          %s247 = scalar_lea.hbm %s1, %s246
          %s248 = sshll.u32 %s241, 4
          %s249 = int_to_ptr.vmem [resolvable:$true] %s248
          %254 = dma.hbm_to_vmem [thread:$0]  %s247, 2048, %s249, %s238, 128, 128, 8
        $region24: #{tpu_custom_call.1} parent=15 // pred_fallthru
          _
        // Predicated region
        $region25: #{tpu_custom_call.1} parent=15 // pred_check
          %p255 = pneg %p106
        $region26: #{tpu_custom_call.1} parent=15 // pred_check_branch
          %257 = sbr.rel (%p255) target = $region28
        $region27: #{tpu_custom_call.1} parent=15 // pred_region
          %p258 = scmp.lt.s32.totalorder %s27, 1
          %s259 = scalar_select %p258, %s27, 1
          %s260 = scalar_lea.vmem %s2, %s259
        $region28: #{tpu_custom_call.1} parent=15 // pred_fallthru
          _
        // Predicated region
        $region29: #{tpu_custom_call.1} parent=15 // pred_check
          %p261 = pneg %p132
        $region30: #{tpu_custom_call.1} parent=15 // pred_check_branch
          %263 = sbr.rel (%p261) target = $region32
        $region31: #{tpu_custom_call.1} parent=15 // pred_region
          %s264 = sand.u32 %s20, 1
          %s265 = scalar_lea.sflag [#allocation6], %s264
          %s266 = sand.u32 %s122, 1
          %s267 = smul.addr %s266, 128
          %s268 = scalar_lea.vmem [#allocation7], %s267
          %s270 = ssub.s32 2048, 2048
          %271 = vsyncadd %s265, %s270
          %s272 = smul.addr %s27, 16
          %s273 = smul.addr %s272, 128
          %s274 = scalar_lea.hbm %s3, %s273
          %s275 = sshll.u32 %s268, 4
          %s276 = int_to_ptr.vmem [resolvable:$true] %s275
          %281 = dma.hbm_to_vmem [thread:$0]  %s274, 2048, %s276, %s265, 128, 128, 8
        $region32: #{tpu_custom_call.1} parent=15 // pred_fallthru
          _
        // Predicated region
        $region33: #{tpu_custom_call.1} parent=15 // pred_check
          %p282 = pneg %p158
        $region34: #{tpu_custom_call.1} parent=15 // pred_check_branch
          %284 = sbr.rel (%p282) target = $region36
        $region35: #{tpu_custom_call.1} parent=15 // pred_region
          %p285 = scmp.lt.s32.totalorder %s27, 1
          %s286 = scalar_select %p285, %s27, 1
          %s287 = scalar_lea.vmem %s4, %s286
        $region36: #{tpu_custom_call.1} parent=15 // pred_fallthru
          _
      $region16: #{tpu_custom_call.1} parent=5 // pred_fallthru
        _
      %p288 = scmp.le.s32.totalorder 1, %s20
      %p289 = scmp.lt.s32.totalorder %s20, 3
      %p290 = pnand %p288, %p289
      %p291 = pneg %p290
      // Predicated region
      $region37: #{tpu_custom_call.1} parent=5 // pred_check
        _
      $region38: #{tpu_custom_call.1} parent=5 // pred_check_branch
        %293 = sbr.rel (%p290) target = $region40
      $region39: #{tpu_custom_call.1} parent=5 // pred_region
        %s294 = ssub.s32 %s20, 1
        %s295 = sand.u32 %s47, 1
        %s296 = scalar_lea.sflag [#allocation3], %s295
        %s297 = sand.u32 %s47, 1
        %s298 = smul.addr %s297, 32
        %s299 = scalar_lea.vmem [#allocation2], %s298
        // Predicated region
        $region41: #{tpu_custom_call.1} parent=39 // pred_check
          %p300 = pneg %p60
        $region42: #{tpu_custom_call.1} parent=39 // pred_check_branch
          %302 = sbr.rel (%p300) target = $region44
        $region43: #{tpu_custom_call.1} parent=39 // pred_region
          %303 = dma.done %s296, 512
        $region44: #{tpu_custom_call.1} parent=39 // pred_fallthru
          _
        %s304 = sand.u32 %s25, 1
        %s305 = scalar_lea.sflag [#allocation6], %s304
        %s306 = sand.u32 %s73, 1
        %s307 = smul.addr %s306, 128
        %s308 = scalar_lea.vmem [#allocation5], %s307
        // Predicated region
        $region45: #{tpu_custom_call.1} parent=39 // pred_check
          %p309 = pneg %p86
        $region46: #{tpu_custom_call.1} parent=39 // pred_check_branch
          %311 = sbr.rel (%p309) target = $region48
        $region47: #{tpu_custom_call.1} parent=39 // pred_region
          %312 = dma.done %s305, 2048
        $region48: #{tpu_custom_call.1} parent=39 // pred_fallthru
          _
        %s313 = sand.u32 %s25, 1
        %s314 = scalar_lea.sflag [#allocation6], %s313
        %s315 = sand.u32 %s125, 1
        %s316 = smul.addr %s315, 128
        %s317 = scalar_lea.vmem [#allocation7], %s316
        // Predicated region
        $region49: #{tpu_custom_call.1} parent=39 // pred_check
          %p318 = pneg %p138
        $region50: #{tpu_custom_call.1} parent=39 // pred_check_branch
          %320 = sbr.rel (%p318) target = $region52
        $region51: #{tpu_custom_call.1} parent=39 // pred_region
          %321 = dma.done %s314, 2048
        $region52: #{tpu_custom_call.1} parent=39 // pred_fallthru
          _
        %s322 = sand.u32 %s47, 1
        %s323 = scalar_lea.sflag [#allocation3], %s322
        %s324 = sand.u32 %s47, 1
        %s325 = smul.addr %s324, 32
        %s326 = scalar_lea.vmem [#allocation2], %s325
        %p327 = pneg %p60
        %p328 = pneg %p57
        %s329 = sand.u32 %s25, 1
        %s330 = scalar_lea.sflag [#allocation6], %s329
        %s331 = sand.u32 %s73, 1
        %s332 = smul.addr %s331, 128
        %s333 = scalar_lea.vmem [#allocation5], %s332
        %p334 = pneg %p86
        %p335 = pneg %p83
        %p336 = scmp.lt.s32.totalorder %s29, 1
        %s337 = scalar_select %p336, %s29, 1
        %s338 = scalar_lea.vmem %s2, %s337
        %p339 = pneg %p112
        %p340 = pneg %p109
        %s341 = sand.u32 %s25, 1
        %s342 = scalar_lea.sflag [#allocation6], %s341
        %s343 = sand.u32 %s125, 1
        %s344 = smul.addr %s343, 128
        %s345 = scalar_lea.vmem [#allocation7], %s344
        %p346 = pneg %p138
        %p347 = pneg %p135
        %p348 = scmp.lt.s32.totalorder %s29, 1
        %s349 = scalar_select %p348, %s29, 1
        %s350 = scalar_lea.vmem %s4, %s349
        %p351 = pneg %p164
        %p352 = pneg %p161
        %p353 = pneg %p192
        %p354 = pneg %p189
        %s355 = sand.u32 %s179, 1
        %s356 = scalar_lea.sflag [#allocation4], %s355
        %s357 = sand.u32 %s179, 1
        %s358 = smul.addr %s357, 32
        %s359 = scalar_lea.vmem [#allocation8], %s358
        %s360 = smul.u32 4, %s30
        %p361 = scmp.lt.s32.totalorder %s29, 1
        %s362 = scalar_select %p361, %s29, 1
        %s363 = scalar_lea.vmem %s2, %s362
        %p364 = scmp.lt.s32.totalorder %s29, 1
        %s365 = scalar_select %p364, %s29, 1
        %s366 = scalar_lea.vmem %s4, %s365
        %s367 = smul.u32 4, %s30
        %v368 = vld [vmem:[%s299] sm:$0xff]
        %v369 = vld [vmem:[%s299 + $0x8] sm:$0xff]
        %v370 = vld [vmem:[%s299 + $0x10] sm:$0xff]
        %v371 = vld [vmem:[%s299 + $0x18] sm:$0xff]
        %v372 = vld [vmem:[%s308] sm:$0xff]
        %v373 = vld [vmem:[%s308 + $0x8] sm:$0xff]
        %v374 = vld [vmem:[%s308 + $0x10] sm:$0xff]
        %v375 = vld [vmem:[%s308 + $0x18] sm:$0xff]
        %v376 = vld [vmem:[%s308 + $0x20] sm:$0xff]
        %v377 = vld [vmem:[%s308 + $0x28] sm:$0xff]
        %v378 = vld [vmem:[%s308 + $0x30] sm:$0xff]
        %v379 = vld [vmem:[%s308 + $0x38] sm:$0xff]
        %v380 = vld [vmem:[%s308 + $0x40] sm:$0xff]
        %v381 = vld [vmem:[%s308 + $0x48] sm:$0xff]
        %v382 = vld [vmem:[%s308 + $0x50] sm:$0xff]
        %v383 = vld [vmem:[%s308 + $0x58] sm:$0xff]
        %v384 = vld [vmem:[%s308 + $0x60] sm:$0xff]
        %v385 = vld [vmem:[%s308 + $0x68] sm:$0xff]
        %v386 = vld [vmem:[%s308 + $0x70] sm:$0xff]
        %v387 = vld [vmem:[%s308 + $0x78] sm:$0xff]
        %v388 = vld [vmem:[%s363] sm:$0x1]
        %v390 = vlaneseq
        %v391 = vshrl.u32 %v390, 7
        %v392 = vsub.s32 0, %v391
        %v393 = vrot.slane %v388, %v392
        %395 = vmatprep.subr.mxu0 0.0
        %396 = vmatpush1.msra.mxu0 %v372
        %397 = vmatprep.subr.mxu0 0.0
        %398 = vmatpush1.msra.mxu0 %v373
        %399 = vmatprep.subr.mxu0 0.0
        %400 = vmatpush1.msra.mxu0 %v374
        %401 = vmatprep.subr.mxu0 0.0
        %402 = vmatpush1.msra.mxu0 %v375
        %403 = vmatprep.subr.mxu0 0.0
        %404 = vmatpush1.msra.mxu0 %v376
        %405 = vmatprep.subr.mxu0 0.0
        %406 = vmatpush1.msra.mxu0 %v377
        %407 = vmatprep.subr.mxu0 0.0
        %408 = vmatpush1.msra.mxu0 %v378
        %409 = vmatprep.subr.mxu0 0.0
        %410 = vmatpush1.msra.mxu0 %v379
        %411 = vmatprep.subr.mxu0 0.0
        %412 = vmatpush1.msra.mxu0 %v380
        %413 = vmatprep.subr.mxu0 0.0
        %414 = vmatpush1.msra.mxu0 %v381
        %415 = vmatprep.subr.mxu0 0.0
        %416 = vmatpush1.msra.mxu0 %v382
        %417 = vmatprep.subr.mxu0 0.0
        %418 = vmatpush1.msra.mxu0 %v383
        %419 = vmatprep.subr.mxu0 0.0
        %420 = vmatpush1.msra.mxu0 %v384
        %421 = vmatprep.subr.mxu0 0.0
        %422 = vmatpush1.msra.mxu0 %v385
        %423 = vmatprep.subr.mxu0 0.0
        %424 = vmatpush1.msra.mxu0 %v386
        %425 = vmatprep.subr.mxu0 0.0
        %426 = vmatpush1.msra.mxu0 %v387
        %427 = vmatprep.subr.mxu0 0.0
        %428 = vmatpush1.msra.mxu0 0.0
        %429 = vmatprep.subr.mxu0 0.0
        %430 = vmatpush1.msra.mxu0 0.0
        %431 = vmatprep.subr.mxu0 0.0
        %432 = vmatpush1.msra.mxu0 0.0
        %433 = vmatprep.subr.mxu0 0.0
        %434 = vmatpush1.msra.mxu0 0.0
        %435 = vmatprep.subr.mxu0 0.0
        %436 = vmatpush1.msra.mxu0 0.0
        %437 = vmatprep.subr.mxu0 0.0
        %438 = vmatpush1.msra.mxu0 0.0
        %439 = vmatprep.subr.mxu0 0.0
        %440 = vmatpush1.msra.mxu0 0.0
        %441 = vmatprep.subr.mxu0 0.0
        %442 = vmatpush1.msra.mxu0 0.0
        %443 = vmatprep.subr.mxu0 0.0
        %444 = vmatpush1.msra.mxu0 0.0
        %445 = vmatprep.subr.mxu0 0.0
        %446 = vmatpush1.msra.mxu0 0.0
        %447 = vmatprep.subr.mxu0 0.0
        %448 = vmatpush1.msra.mxu0 0.0
        %449 = vmatprep.subr.mxu0 0.0
        %450 = vmatpush1.msra.mxu0 0.0
        %451 = vmatprep.subr.mxu0 0.0
        %452 = vmatpush1.msra.mxu0 0.0
        %453 = vmatprep.subr.mxu0 0.0
        %454 = vmatpush1.msra.mxu0 0.0
        %455 = vmatprep.subr.mxu0 0.0
        %456 = vmatpush1.msra.mxu0 0.0
        %457 = vmatprep.subr.mxu0 0.0
        %458 = vmatpush1.msra.mxu0 0.0
        %459 = vmatprep.mubr.f32.mxu0 0.0
        %460 = vmatmul.mubr.f32.gmra.mrb[0].mxu0 %v368
        %v461 = vpop.f32.mrb[0].mxu0
        %v462 = vadd.f32 %v393, %v461
        %v463 = vpop.f32.mrb[0].mxu0
        %464 = vmatprep.mubr.f32.mxu0 0.0
        %465 = vmatmul.mubr.f32.gmra.mrb[0].mxu0 %v369
        %v466 = vpop.f32.mrb[0].mxu0
        %v467 = vadd.f32 %v393, %v466
        %v468 = vpop.f32.mrb[0].mxu0
        %469 = vmatprep.mubr.f32.mxu0 0.0
        %470 = vmatmul.mubr.f32.gmra.mrb[0].mxu0 %v370
        %v471 = vpop.f32.mrb[0].mxu0
        %v472 = vadd.f32 %v393, %v471
        %v473 = vpop.f32.mrb[0].mxu0
        %474 = vmatprep.mubr.f32.mxu0 0.0
        %475 = vmatmul.mubr.f32.gmra.mrb[0].mxu0 %v371
        %v476 = vpop.f32.mrb[0].mxu0
        %v477 = vadd.f32 %v393, %v476
        %v478 = vpop.f32.mrb[0].mxu0
        %479 = vdwg.mxu0
        %v480 = vmax.f32 %v462, 0.0
        %v481 = vmax.f32 %v467, 0.0
        %v482 = vmax.f32 %v472, 0.0
        %v483 = vmax.f32 %v477, 0.0
        %v484 = vld [vmem:[%s317] sm:$0xff]
        %v485 = vld [vmem:[%s317 + $0x8] sm:$0xff]
        %v486 = vld [vmem:[%s317 + $0x10] sm:$0xff]
        %v487 = vld [vmem:[%s317 + $0x18] sm:$0xff]
        %v488 = vld [vmem:[%s317 + $0x20] sm:$0xff]
        %v489 = vld [vmem:[%s317 + $0x28] sm:$0xff]
        %v490 = vld [vmem:[%s317 + $0x30] sm:$0xff]
        %v491 = vld [vmem:[%s317 + $0x38] sm:$0xff]
        %v492 = vld [vmem:[%s317 + $0x40] sm:$0xff]
        %v493 = vld [vmem:[%s317 + $0x48] sm:$0xff]
        %v494 = vld [vmem:[%s317 + $0x50] sm:$0xff]
        %v495 = vld [vmem:[%s317 + $0x58] sm:$0xff]
        %v496 = vld [vmem:[%s317 + $0x60] sm:$0xff]
        %v497 = vld [vmem:[%s317 + $0x68] sm:$0xff]
        %v498 = vld [vmem:[%s317 + $0x70] sm:$0xff]
        %v499 = vld [vmem:[%s317 + $0x78] sm:$0xff]
        %500 = vmatprep.subr.mxu0 0.0
        %501 = vmatpush1.msra.mxu0 %v484
        %502 = vmatprep.subr.mxu0 0.0
        %503 = vmatpush1.msra.mxu0 %v485
        %504 = vmatprep.subr.mxu0 0.0
        %505 = vmatpush1.msra.mxu0 %v486
        %506 = vmatprep.subr.mxu0 0.0
        %507 = vmatpush1.msra.mxu0 %v487
        %508 = vmatprep.subr.mxu0 0.0
        %509 = vmatpush1.msra.mxu0 %v488
        %510 = vmatprep.subr.mxu0 0.0
        %511 = vmatpush1.msra.mxu0 %v489
        %512 = vmatprep.subr.mxu0 0.0
        %513 = vmatpush1.msra.mxu0 %v490
        %514 = vmatprep.subr.mxu0 0.0
        %515 = vmatpush1.msra.mxu0 %v491
        %516 = vmatprep.subr.mxu0 0.0
        %517 = vmatpush1.msra.mxu0 %v492
        %518 = vmatprep.subr.mxu0 0.0
        %519 = vmatpush1.msra.mxu0 %v493
        %520 = vmatprep.subr.mxu0 0.0
        %521 = vmatpush1.msra.mxu0 %v494
        %522 = vmatprep.subr.mxu0 0.0
        %523 = vmatpush1.msra.mxu0 %v495
        %524 = vmatprep.subr.mxu0 0.0
        %525 = vmatpush1.msra.mxu0 %v496
        %526 = vmatprep.subr.mxu0 0.0
        %527 = vmatpush1.msra.mxu0 %v497
        %528 = vmatprep.subr.mxu0 0.0
        %529 = vmatpush1.msra.mxu0 %v498
        %530 = vmatprep.subr.mxu0 0.0
        %531 = vmatpush1.msra.mxu0 %v499
        %532 = vmatprep.subr.mxu0 0.0
        %533 = vmatpush1.msra.mxu0 0.0
        %534 = vmatprep.subr.mxu0 0.0
        %535 = vmatpush1.msra.mxu0 0.0
        %536 = vmatprep.subr.mxu0 0.0
        %537 = vmatpush1.msra.mxu0 0.0
        %538 = vmatprep.subr.mxu0 0.0
        %539 = vmatpush1.msra.mxu0 0.0
        %540 = vmatprep.subr.mxu0 0.0
        %541 = vmatpush1.msra.mxu0 0.0
        %542 = vmatprep.subr.mxu0 0.0
        %543 = vmatpush1.msra.mxu0 0.0
        %544 = vmatprep.subr.mxu0 0.0
        %545 = vmatpush1.msra.mxu0 0.0
        %546 = vmatprep.subr.mxu0 0.0
        %547 = vmatpush1.msra.mxu0 0.0
        %548 = vmatprep.subr.mxu0 0.0
        %549 = vmatpush1.msra.mxu0 0.0
        %550 = vmatprep.subr.mxu0 0.0
        %551 = vmatpush1.msra.mxu0 0.0
        %552 = vmatprep.subr.mxu0 0.0
        %553 = vmatpush1.msra.mxu0 0.0
        %554 = vmatprep.subr.mxu0 0.0
        %555 = vmatpush1.msra.mxu0 0.0
        %556 = vmatprep.subr.mxu0 0.0
        %557 = vmatpush1.msra.mxu0 0.0
        %558 = vmatprep.subr.mxu0 0.0
        %559 = vmatpush1.msra.mxu0 0.0
        %560 = vmatprep.subr.mxu0 0.0
        %561 = vmatpush1.msra.mxu0 0.0
        %562 = vmatprep.subr.mxu0 0.0
        %563 = vmatpush1.msra.mxu0 0.0
        %564 = vmatprep.mubr.f32.mxu0 0.0
        %565 = vmatmul.mubr.f32.gmra.mrb[0].mxu0 %v480
        %v566 = vpop.f32.mrb[0].mxu0
        %v567 = vadd.f32 0.0, %v566
        %v568 = vpop.f32.mrb[0].mxu0
        %569 = vmatprep.mubr.f32.mxu0 0.0
        %570 = vmatmul.mubr.f32.gmra.mrb[0].mxu0 %v481
        %v571 = vpop.f32.mrb[0].mxu0
        %v572 = vadd.f32 0.0, %v571
        %v573 = vpop.f32.mrb[0].mxu0
        %574 = vmatprep.mubr.f32.mxu0 0.0
        %575 = vmatmul.mubr.f32.gmra.mrb[0].mxu0 %v482
        %v576 = vpop.f32.mrb[0].mxu0
        %v577 = vadd.f32 0.0, %v576
        %v578 = vpop.f32.mrb[0].mxu0
        %579 = vmatprep.mubr.f32.mxu0 0.0
        %580 = vmatmul.mubr.f32.gmra.mrb[0].mxu0 %v483
        %v581 = vpop.f32.mrb[0].mxu0
        %v582 = vadd.f32 0.0, %v581
        %v583 = vpop.f32.mrb[0].mxu0
        %584 = vdwg.mxu0
        %v585 = vadd.f32 %v368, %v567
        %v586 = vadd.f32 %v369, %v572
        %v587 = vadd.f32 %v370, %v577
        %v588 = vadd.f32 %v371, %v582
        %v589 = vld [vmem:[%s366] sm:$0x1]
        %v591 = vlaneseq
        %v592 = vshrl.u32 %v591, 7
        %v593 = vsub.s32 0, %v592
        %v594 = vrot.slane %v589, %v593
        %v596 = vadd.f32 %v585, %v594
        %v597 = vadd.f32 %v586, %v594
        %v598 = vadd.f32 %v587, %v594
        %v599 = vadd.f32 %v588, %v594
        %600 = vadd.xlane.f32.xlu0 %v596
        %v601 = vpop.xlane.xlu0 %600
        %602 = vadd.xlane.f32.xlu0 %v597
        %v603 = vpop.xlane.xlu0 %602
        %604 = vadd.xlane.f32.xlu0 %v598
        %v605 = vpop.xlane.xlu0 %604
        %606 = vadd.xlane.f32.xlu0 %v599
        %v607 = vpop.xlane.xlu0 %606
        %v608 = vrot.slane %v601, 4
        %v609 = vadd.f32 %v601, %v608
        %v610 = vrot.slane %v609, 2
        %v611 = vadd.f32 %v609, %v610
        %v612 = vrot.slane %v611, 1
        %v613 = vadd.f32 %v611, %v612
        %v614 = vrot.slane %v603, 4
        %v615 = vadd.f32 %v603, %v614
        %v616 = vrot.slane %v615, 2
        %v617 = vadd.f32 %v615, %v616
        %v618 = vrot.slane %v617, 1
        %v619 = vadd.f32 %v617, %v618
        %v620 = vrot.slane %v605, 4
        %v621 = vadd.f32 %v605, %v620
        %v622 = vrot.slane %v621, 2
        %v623 = vadd.f32 %v621, %v622
        %v624 = vrot.slane %v623, 1
        %v625 = vadd.f32 %v623, %v624
        %v626 = vrot.slane %v607, 4
        %v627 = vadd.f32 %v607, %v626
        %v628 = vrot.slane %v627, 2
        %v629 = vadd.f32 %v627, %v628
        %v630 = vrot.slane %v629, 1
        %v631 = vadd.f32 %v629, %v630
        %v632 = vmul.f32 %v596, %v596
        %v633 = vmul.f32 %v597, %v597
        %v634 = vmul.f32 %v598, %v598
        %v635 = vmul.f32 %v599, %v599
        %636 = vadd.xlane.f32.xlu0 %v632
        %v637 = vpop.xlane.xlu0 %636
        %638 = vadd.xlane.f32.xlu0 %v633
        %v639 = vpop.xlane.xlu0 %638
        %640 = vadd.xlane.f32.xlu0 %v634
        %v641 = vpop.xlane.xlu0 %640
        %642 = vadd.xlane.f32.xlu0 %v635
        %v643 = vpop.xlane.xlu0 %642
        %v644 = vrot.slane %v637, 4
        %v645 = vadd.f32 %v637, %v644
        %v646 = vrot.slane %v645, 2
        %v647 = vadd.f32 %v645, %v646
        %v648 = vrot.slane %v647, 1
        %v649 = vadd.f32 %v647, %v648
        %v650 = vrot.slane %v639, 4
        %v651 = vadd.f32 %v639, %v650
        %v652 = vrot.slane %v651, 2
        %v653 = vadd.f32 %v651, %v652
        %v654 = vrot.slane %v653, 1
        %v655 = vadd.f32 %v653, %v654
        %v656 = vrot.slane %v641, 4
        %v657 = vadd.f32 %v641, %v656
        %v658 = vrot.slane %v657, 2
        %v659 = vadd.f32 %v657, %v658
        %v660 = vrot.slane %v659, 1
        %v661 = vadd.f32 %v659, %v660
        %v662 = vrot.slane %v643, 4
        %v663 = vadd.f32 %v643, %v662
        %v664 = vrot.slane %v663, 2
        %v665 = vadd.f32 %v663, %v664
        %v666 = vrot.slane %v665, 1
        %v667 = vadd.f32 %v665, %v666
        %v668 = vmul.f32 %v613, 0.00390625
        %v669 = vmul.f32 %v619, 0.00390625
        %v670 = vmul.f32 %v625, 0.00390625
        %v671 = vmul.f32 %v631, 0.00390625
        %v672 = vmul.f32 %v668, %v613
        %v673 = vmul.f32 %v669, %v619
        %v674 = vmul.f32 %v670, %v625
        %v675 = vmul.f32 %v671, %v631
        %v676 = vsub.f32 %v649, %v672
        %v677 = vsub.f32 %v655, %v673
        %v678 = vsub.f32 %v661, %v674
        %v679 = vsub.f32 %v667, %v675
        %v680 = vmul.f32 %v676, 0.003921569
        %v681 = vmul.f32 %v677, 0.003921569
        %v682 = vmul.f32 %v678, 0.003921569
        %v683 = vmul.f32 %v679, 0.003921569
        %v684 = vadd.f32 %v680, 1e-05
        %v685 = vadd.f32 %v681, 1e-05
        %v686 = vadd.f32 %v682, 1e-05
        %v687 = vadd.f32 %v683, 1e-05
        %v688 = vrsqrt.pop %v684
        %v689 = vrsqrt.pop %v685
        %v690 = vrsqrt.pop %v686
        %v691 = vrsqrt.pop %v687
        %v692 = vsub.f32 %v596, %v668
        %v693 = vsub.f32 %v597, %v669
        %v694 = vsub.f32 %v598, %v670
        %v695 = vsub.f32 %v599, %v671
        %v696 = vmul.f32 %v692, %v688
        %v697 = vmul.f32 %v693, %v689
        %v698 = vmul.f32 %v694, %v690
        %v699 = vmul.f32 %v695, %v691
        %700 = vst [vmem:[%s359] sm:$0xff] %v696
        %701 = vst [vmem:[%s359 + $0x8] sm:$0xff] %v697
        %702 = vst [vmem:[%s359 + $0x10] sm:$0xff] %v698
        %703 = vst [vmem:[%s359 + $0x18] sm:$0xff] %v699
        %s704 = sand.u32 %s179, 1
        %s705 = scalar_lea.sflag [#allocation4], %s704
        %s706 = sand.u32 %s179, 1
        %s707 = smul.addr %s706, 32
        %s708 = scalar_lea.vmem [#allocation8], %s707
        // Predicated region
        $region53: #{tpu_custom_call.1} parent=39 // pred_check
          %p709 = pneg %p189
        $region54: #{tpu_custom_call.1} parent=39 // pred_check_branch
          %711 = sbr.rel (%p709) target = $region56
        $region55: #{tpu_custom_call.1} parent=39 // pred_region
          %s712 = smul.u32 4, %s30
          %s714 = ssub.s32 512, 512
          %715 = vsyncadd %s705, %s714
          %s716 = smul.addr %s29, 4
          %s717 = sadd.s32 %s712, %s716
          %s718 = smul.addr %s717, 128
          %s719 = scalar_lea.hbm %s5, %s718
          %s720 = sshll.u32 %s708, 4
          %s721 = int_to_ptr.vmem [resolvable:$true] %s720
          %726 = dma.vmem_to_hbm [thread:$0]  %s721, 512, %s719, %s705, 128, 128, 8
        $region56: #{tpu_custom_call.1} parent=39 // pred_fallthru
          _
      $region40: #{tpu_custom_call.1} parent=5 // pred_fallthru
        _
      %p727 = scmp.le.s32.totalorder 2, %s20
      // Predicated region
      $region57: #{tpu_custom_call.1} parent=5 // pred_check
        %p728 = pneg %p727
      $region58: #{tpu_custom_call.1} parent=5 // pred_check_branch
        %730 = sbr.rel (%p728) target = $region60
      $region59: #{tpu_custom_call.1} parent=5 // pred_region
        %s731 = ssub.s32 %s20, 2
        // Predicated region
        $region61: #{tpu_custom_call.1} parent=59 // pred_check
          %p732 = pneg %p195
        $region62: #{tpu_custom_call.1} parent=59 // pred_check_branch
          %734 = sbr.rel (%p732) target = $region64
        $region63: #{tpu_custom_call.1} parent=59 // pred_region
          %s735 = sand.u32 %s180, 1
          %s736 = scalar_lea.sflag [#allocation4], %s735
          %s737 = sand.u32 %s180, 1
          %s738 = smul.addr %s737, 32
          %s739 = scalar_lea.vmem [#allocation8], %s738
          %740 = dma.done %s736, 512
        $region64: #{tpu_custom_call.1} parent=59 // pred_fallthru
          _
      $region60: #{tpu_custom_call.1} parent=5 // pred_fallthru
        _
    $region6: #{tpu_custom_call.1} parent=1 // loop_footer
      %s24 = sadd.s32 1, %s20
    $region7: #{tpu_custom_call.1} parent=1 // loop_footer_branch
      %19 = sbr.rel target = $region3
    $region8: #{tpu_custom_call.1} parent=1 // loop_exit
      _
    %741 = vsyncpa [#allocation3], 1
    %s742 = scalar_lea.sflag [#allocation3], 1
    %743 = vsyncpa %s742, 1
    %744 = vsyncpa [#allocation6], 1
    %s745 = scalar_lea.sflag [#allocation6], 1
    %746 = vsyncpa %s745, 1
    %747 = vsyncpa [#allocation4], 1
    %s748 = scalar_lea.sflag [#allocation4], 1
    %749 = vsyncpa %s748, 1

</llo_original>
